<compile_context>
chip_gen: v6e
topology: v6e:2x2x1
jax: 0.10.0
libtpu: 0.0.40
codegen_flags: <defaults>
</compile_context>

<pallas_src>
import math

import jax
import jax.numpy as jnp
from jax.experimental import pallas as pl
from jax.experimental.pallas import tpu as pltpu


def _round_up(x, m):
    return (x + m - 1) // m * m


def _packed_linear_kernel(x_ref, w_ref, b_ref, o_ref):
    # x_ref: [TM, g*d_inp]   w_ref: [g*d_inp, g*d_model] (compute dtype)
    # b_ref: [1, g*d_model] (f32)   o_ref: [TM, g*d_model]
    x = x_ref[...].astype(w_ref.dtype)            # bf16 MXU operands (v5e fix)
    acc = jnp.dot(x, w_ref[...], preferred_element_type=jnp.float32)
    o_ref[...] = (acc + b_ref[...]).astype(o_ref.dtype)


def make_time_feature_embedding(weight, bias, *,
                                compute_dtype=jnp.bfloat16,
                                out_dtype=None,
                                tile_out_bytes=4 << 20,
                                min_steps=8):
    """Returns apply(x) computing x @ weight.T + bias for x: [B, L, d_inp].

    out_dtype=None keeps the input dtype (module semantics); pass jnp.bfloat16
    if downstream tolerates it to halve the dominant output write traffic.
    """
    d_model, d_inp = weight.shape

    # ---- packing-factor candidates (g*d_model must be a multiple of 128) --
    g_out = 128 // math.gcd(d_model, 128)
    g_in = 128 // math.gcd(d_inp, 128)
    g_full = g_out * g_in // math.gcd(g_out, g_in)        # also lane-dense x
    w_itemsize = jnp.dtype(compute_dtype).itemsize
    if g_full * d_inp * g_full * d_model * w_itemsize > (2 << 20):
        g_full = g_out                                     # cap resident weight
    g_candidates = []
    g = g_out
    while g <= g_full:
        g_candidates.append(g)
        g *= 2

    # ---- hoisted weight/bias prep: once per weight, NOT per forward call --
    w_t = weight.T.astype(compute_dtype)                   # [d_inp, d_model]
    packed = {}
    for g in g_candidates:
        w_big = jnp.kron(jnp.eye(g, dtype=w_t.dtype), w_t)  # [g*di, g*dm]
        b_big = jnp.tile(bias.astype(jnp.float32), g).reshape(1, g * d_model)
        packed[g] = (w_big, b_big)

    def apply(x):
        assert x.shape[-1] == d_inp
        B, L = x.shape[0], x.shape[1]
        M = B * L
        o_dtype = jnp.dtype(out_dtype) if out_dtype is not None else x.dtype

        # -- adaptive g: avoid pad / [:M]-slice copies whenever possible ----
        g = None
        for cand in reversed(g_candidates):
            if M % cand == 0:
                g = cand
                break
        pad = 0
        if g is None:                       # rare fallback: pad <= g_out-1 rows
            g = g_candidates[0]
            pad = (-M) % g
        M_pad = M + pad
        Mp = M_pad // g
        w_big, b_big = packed[g]

        x2d = x.reshape(M, d_inp)
        if pad:
            x2d = jnp.pad(x2d, ((0, pad), (0, 0)))
        x_packed = x2d.reshape(Mp, g * d_inp)              # free reshape

        # -- row tiling -------------------------------------------------------
        o_itemsize = jnp.dtype(o_dtype).itemsize
        x_itemsize = jnp.dtype(x.dtype).itemsize
        row_out_bytes = g * d_model * o_itemsize
        cap_rows = max(8, (tile_out_bytes // row_out_bytes) // 8 * 8)
        if Mp <= 64:
            tm_rows = Mp                                    # tiny: one full block
        else:
            want = _round_up(pl.cdiv(Mp, min_steps), 8)     # >= min_steps steps
            tm_rows = min(cap_rows, max(64, want))          # megacore + pipelining
        n_tiles = pl.cdiv(Mp, tm_rows)

        # -- compiler params ----------------------------------------------------
        est_vmem = (2 * tm_rows * g * (d_inp * x_itemsize + d_model * o_itemsize)
                    + w_big.size * w_itemsize + b_big.size * 4)
        cp_kwargs = dict(dimension_semantics=("parallel",))
        if est_vmem > (14 << 20):           # only when above v5e scoped default
            cp_kwargs["vmem_limit_bytes"] = min(int(1.5 * est_vmem) + (4 << 20),
                                                48 << 20)

        cost = pl.CostEstimate(
            flops=2 * M_pad * d_inp * d_model * g,          # padded MXU flops
            transcendentals=0,
            bytes_accessed=int(M_pad * d_inp * x_itemsize
                               + M_pad * d_model * o_itemsize
                               + w_big.size * w_itemsize + b_big.size * 4),
        )

        out_packed = pl.pallas_call(
            _packed_linear_kernel,
            out_shape=jax.ShapeDtypeStruct((Mp, g * d_model), o_dtype),
            grid_spec=pl.GridSpec(
                grid=(n_tiles,),
                in_specs=[
                    pl.BlockSpec((tm_rows, g * d_inp), lambda i: (i, 0)),
                    pl.BlockSpec((g * d_inp, g * d_model), lambda i: (0, 0),
                                 pipeline_mode=pl.Buffered(1)),
                    pl.BlockSpec((1, g * d_model), lambda i: (0, 0),
                                 pipeline_mode=pl.Buffered(1)),
                ],
                out_specs=pl.BlockSpec((tm_rows, g * d_model), lambda i: (i, 0)),
            ),
            compiler_params=pltpu.CompilerParams(**cp_kwargs),
            cost_estimate=cost,
        )(x_packed, w_big, b_big)

        out = out_packed.reshape(M_pad, d_model)            # free reshape
        if pad:
            out = out[:M]                                   # only on rare fallback
        return out.reshape(B, L, d_model)

    return apply


if __name__ == "__main__":
    # freq='h' -> d_inp = 4 ; small d_model
    d_inp, d_model = 4, 32

    key = jax.random.PRNGKey(0)
    kx, kw, kb, kx2 = jax.random.split(key, 4)

    # PyTorch-style init: U(-1/sqrt(d_inp), 1/sqrt(d_inp))
    bound = 1.0 / math.sqrt(d_inp)
    weight = jax.random.uniform(kw, (d_model, d_inp), jnp.float32, -bound, bound)
    bias = jax.random.uniform(kb, (d_model,), jnp.float32, -bound, bound)

    # Weight prep (kron / tile / cast) happens exactly once, here:
    fwd = jax.jit(make_time_feature_embedding(weight, bias))

    # bf16-operand / f32-accumulate rounding model of the kernel (for checks).
    w_r = weight.astype(jnp.bfloat16).astype(jnp.float32)

    # Small demo shape (M = 16 -> g = 16, no padding, single block).
    B, L = 2, 8
    x = jax.random.normal(kx, (B, L, d_inp), jnp.float32)
    y = jax.block_until_ready(fwd(x))
    assert y.shape == (B, L, d_model)
    x_r = x.astype(jnp.bfloat16).astype(jnp.float32)
    assert jnp.allclose(y, x_r @ w_r.T + bias, atol=1e-4, rtol=1e-4)
    assert jnp.allclose(y, x @ weight.T + bias, atol=5e-2, rtol=1e-2)

    # M = 8*97 = 776: adaptive g picks g=8 -> no pad copy, no [:M] slice copy.
    B2, L2 = 8, 97
    x2 = jax.random.normal(kx2, (B2, L2, d_inp), jnp.float32)
    y2 = jax.block_until_ready(fwd(x2))
    assert y2.shape == (B2, L2, d_model)
    x2_r = x2.astype(jnp.bfloat16).astype(jnp.float32)
    assert jnp.allclose(y2, x2_r @ w_r.T + bias, atol=1e-4, rtol=1e-4)
    assert jnp.allclose(y2, x2 @ weight.T + bias, atol=5e-2, rtol=1e-2)

    print("KERNEL_OK")
</pallas_src>

<mosaic_0001>
module attributes {stable_mosaic.version = 11 : i64} {
  func.func @_packed_linear_kernel(%arg0: i32, %arg1: memref<1x64xf32, #tpu.memory_space<vmem>>, %arg2: memref<64x512xbf16, #tpu.memory_space<vmem>>, %arg3: memref<1x512xf32, #tpu.memory_space<vmem>>, %arg4: memref<1x512xf32, #tpu.memory_space<vmem>>) attributes {dimension_semantics = [#tpu.dimension_semantics<parallel>], iteration_bounds = array<i64: 1>, scalar_prefetch = 0 : i64, scratch_operands = 0 : i64, tpu.core_type = #tpu.core_type<tc>, window_params = [{transform_indices = @transform_0, window_bounds = array<i64: 1, 64>}, {pipeline_mode = #tpu.pipeline_mode<synchronous>, transform_indices = @transform_1, window_bounds = array<i64: 64, 512>}, {pipeline_mode = #tpu.pipeline_mode<synchronous>, transform_indices = @transform_2, window_bounds = array<i64: 1, 512>}, {transform_indices = @transform_3, window_bounds = array<i64: 1, 512>}]} {
    %c0 = arith.constant 0 : index
    %c0_0 = arith.constant 0 : index
    %0 = vector.load %arg1[%c0, %c0_0] : memref<1x64xf32, #tpu.memory_space<vmem>>, vector<1x64xf32>
    %1 = arith.truncf %0 : vector<1x64xf32> to vector<1x64xbf16>
    %c0_1 = arith.constant 0 : index
    %c0_2 = arith.constant 0 : index
    %2 = vector.load %arg2[%c0_1, %c0_2] : memref<64x512xbf16, #tpu.memory_space<vmem>>, vector<64x512xbf16>
    %cst = arith.constant dense<0.000000e+00> : vector<1x512xf32>
    %3 = tpu.matmul %1, %2, %cst {dimension_numbers = #tpu.dot_dimension_numbers<[1], [0], [0], [1], [0, 0, 1, 1], [], []>} : vector<1x64xbf16>, vector<64x512xbf16>, vector<1x512xf32> -> vector<1x512xf32>
    %c0_3 = arith.constant 0 : index
    %c0_4 = arith.constant 0 : index
    %4 = vector.load %arg3[%c0_3, %c0_4] : memref<1x512xf32, #tpu.memory_space<vmem>>, vector<1x512xf32>
    %5 = arith.addf %3, %4 : vector<1x512xf32>
    %c0_5 = arith.constant 0 : index
    %c0_6 = arith.constant 0 : index
    %6 = vector.load %arg4[%c0_5, %c0_6] : memref<1x512xf32, #tpu.memory_space<vmem>>, vector<1x512xf32>
    tpu.vector_store %arg4[%c0_5, %c0_6], %5 {strides = array<i32>} : memref<1x512xf32, #tpu.memory_space<vmem>>, vector<1x512xf32>,
    return
  }
  func.func @transform_0(%arg0: i32) -> (i32, i32) {
    %c0_i32 = arith.constant 0 : i32
    %c0_i32_0 = arith.constant 0 : i32
    return %arg0, %c0_i32 : i32, i32
  }
  func.func @transform_1(%arg0: i32) -> (i32, i32) {
    %c0_i32 = arith.constant 0 : i32
    %c0_i32_0 = arith.constant 0 : i32
    %c0_i32_1 = arith.constant 0 : i32
    return %c0_i32, %c0_i32_0 : i32, i32
  }
  func.func @transform_2(%arg0: i32) -> (i32, i32) {
    %c0_i32 = arith.constant 0 : i32
    %c0_i32_0 = arith.constant 0 : i32
    %c0_i32_1 = arith.constant 0 : i32
    return %c0_i32, %c0_i32_0 : i32, i32
  }
  func.func @transform_3(%arg0: i32) -> (i32, i32) {
    %c0_i32 = arith.constant 0 : i32
    %c0_i32_0 = arith.constant 0 : i32
    return %arg0, %c0_i32 : i32, i32
  }
}

</mosaic_0001>

<llo_original>
// kernel: apply.1
$region0: #{apply.1}
  #allocation0 [shape = 'u32[]', space=smem, size = 0x4, offset = 0x4, fixed_abs, tag = 'smem constant byte address 0x4 - core index']
  #allocation1 [shape = 'u32[144,128]{1,0:T(1,128)}', space=vmem, size = 0x12000, scoped, tag = 'internal scratch']
  %s0 = inlined_call_operand.vmem [shape: f32[1,64], index: 0, kind: input, shape index: {}]
  %s1 = inlined_call_operand.hbm [shape: bf16[64,512], index: 1, kind: input, shape index: {}]
  %s2 = inlined_call_operand.vmem [shape: f32[1,512], index: 2, kind: input, shape index: {}]
  %s3 = inlined_call_operand.vmem [shape: f32[1,512], index: 3, kind: output, shape index: {}]
  %s4 = sld [smem:[#allocation0]]
  $region26: #{apply.1} parent=0
    _
  %s6 = ssub.s32 1, %s4
  %s7 = scalar_select 0, %s6, %s4
  $region1: #{apply.1} parent=0
    #allocation2 [shape = 'u8[65536]{0}', space=vmem, size = 0x10000, scoped, tag = 'input window, operand 1, single buffered']
    #allocation3 [shape = 's32[1]{0}', space=sflag, size = 0x4, scoped, tag = 'scoped memory for apply.1']
    %8 = vsyncpa [#allocation3], 0
    // Predicated region
    $region2: #{apply.1} parent=1 // pred_check
      _
    $region3: #{apply.1} parent=1 // pred_check_branch
      %10 = sbr.rel (0) target = $region5
    $region4: #{apply.1} parent=1 // pred_region
      _
    $region5: #{apply.1} parent=1 // pred_fallthru
      _
    // Predicated region
    $region6: #{apply.1} parent=1 // pred_check
      _
    $region7: #{apply.1} parent=1 // pred_check_branch
      %12 = sbr.rel (0) target = $region9
    $region8: #{apply.1} parent=1 // pred_region
      %s14 = ssub.s32 2048, 2048
      %15 = vsyncadd [#allocation3], %s14
      %s16 = sshll.u32 [#allocation2], 4
      %s17 = int_to_ptr.vmem [resolvable:$true] %s16
      %22 = dma.hbm_to_vmem [thread:$0]  %s1, 2048, %s17, [#allocation3], 256, 256, 16
    $region9: #{apply.1} parent=1 // pred_fallthru
      _
    // Predicated region
    $region10: #{apply.1} parent=1 // pred_check
      _
    $region11: #{apply.1} parent=1 // pred_check_branch
      %24 = sbr.rel (0) target = $region13
    $region12: #{apply.1} parent=1 // pred_region
      _
    $region13: #{apply.1} parent=1 // pred_fallthru
      _
    // Predicated region
    $region14: #{apply.1} parent=1 // pred_check
      _
    $region15: #{apply.1} parent=1 // pred_check_branch
      %26 = sbr.rel (0) target = $region17
    $region16: #{apply.1} parent=1 // pred_region
      %27 = dma.done [#allocation3], 2048
    $region17: #{apply.1} parent=1 // pred_fallthru
      _
    %v29 = vld [vmem:[%s0] sm:$0x1]
    %v30 = vpack.c.bf16 %v29, %v29
    %v31 = vld [vmem:[#allocation2] sm:$0xff]
    %v32 = vld [vmem:[#allocation2 + $0x8] sm:$0xff]
    %v33 = vld [vmem:[#allocation2 + $0x10] sm:$0xff]
    %v34 = vld [vmem:[#allocation2 + $0x18] sm:$0xff]
    %v35 = vld [vmem:[#allocation2 + $0x20] sm:$0xff]
    %v36 = vld [vmem:[#allocation2 + $0x28] sm:$0xff]
    %v37 = vld [vmem:[#allocation2 + $0x30] sm:$0xff]
    %v38 = vld [vmem:[#allocation2 + $0x38] sm:$0xff]
    %v39 = vld [vmem:[#allocation2 + $0x40] sm:$0xff]
    %v40 = vld [vmem:[#allocation2 + $0x48] sm:$0xff]
    %v41 = vld [vmem:[#allocation2 + $0x50] sm:$0xff]
    %v42 = vld [vmem:[#allocation2 + $0x58] sm:$0xff]
    %v43 = vld [vmem:[#allocation2 + $0x60] sm:$0xff]
    %v44 = vld [vmem:[#allocation2 + $0x68] sm:$0xff]
    %v45 = vld [vmem:[#allocation2 + $0x70] sm:$0xff]
    %v46 = vld [vmem:[#allocation2 + $0x78] sm:$0xff]
    %v47 = vld [vmem:[%s2] sm:$0xf]
    %v64 = vunpack.c.l.b16 %v31
    %v65 = vunpack.c.h.b16 %v31
    %v66 = vunpack.c.l.b16 %v32
    %v67 = vunpack.c.h.b16 %v32
    %v68 = vunpack.c.l.b16 %v33
    %v69 = vunpack.c.h.b16 %v33
    %v70 = vunpack.c.l.b16 %v34
    %v71 = vunpack.c.h.b16 %v34
    %v72 = vunpack.c.l.b16 %v35
    %v73 = vunpack.c.h.b16 %v35
    %v74 = vunpack.c.l.b16 %v36
    %v75 = vunpack.c.h.b16 %v36
    %v76 = vunpack.c.l.b16 %v37
    %v77 = vunpack.c.h.b16 %v37
    %v78 = vunpack.c.l.b16 %v38
    %v79 = vunpack.c.h.b16 %v38
    %v80 = vunpack.c.l.b16 %v39
    %v81 = vunpack.c.h.b16 %v39
    %v82 = vunpack.c.l.b16 %v40
    %v83 = vunpack.c.h.b16 %v40
    %v84 = vunpack.c.l.b16 %v41
    %v85 = vunpack.c.h.b16 %v41
    %v86 = vunpack.c.l.b16 %v42
    %v87 = vunpack.c.h.b16 %v42
    %v88 = vunpack.c.l.b16 %v43
    %v89 = vunpack.c.h.b16 %v43
    %v90 = vunpack.c.l.b16 %v44
    %v91 = vunpack.c.h.b16 %v44
    %v92 = vunpack.c.l.b16 %v45
    %v93 = vunpack.c.h.b16 %v45
    %v94 = vunpack.c.l.b16 %v46
    %v95 = vunpack.c.h.b16 %v46
    %v96 = vpack.c.b16 %v68, %v64
    %v97 = vpack.c.b16 %v69, %v65
    %v98 = vpack.c.b16 %v70, %v66
    %v99 = vpack.c.b16 %v71, %v67
    %v100 = vpack.c.b16 %v76, %v72
    %v101 = vpack.c.b16 %v77, %v73
    %v102 = vpack.c.b16 %v78, %v74
    %v103 = vpack.c.b16 %v79, %v75
    %v104 = vpack.c.b16 %v84, %v80
    %v105 = vpack.c.b16 %v85, %v81
    %v106 = vpack.c.b16 %v86, %v82
    %v107 = vpack.c.b16 %v87, %v83
    %v108 = vpack.c.b16 %v92, %v88
    %v109 = vpack.c.b16 %v93, %v89
    %v110 = vpack.c.b16 %v94, %v90
    %v111 = vpack.c.b16 %v95, %v91
    %v129 = vlaneseq
    %v130 = vshrl.u32 %v129, 7
    %v131 = vsub.s32 0, %v130
    %v132 = vrot.slane %v47, %v131
    %v133 = vlaneseq
    %v134 = vshrl.u32 %v133, 7
    %v135 = vsub.s32 1, %v134
    %v136 = vrot.slane %v47, %v135
    %v137 = vlaneseq
    %v138 = vshrl.u32 %v137, 7
    %v139 = vsub.s32 2, %v138
    %v140 = vrot.slane %v47, %v139
    %v141 = vlaneseq
    %v142 = vshrl.u32 %v141, 7
    %v143 = vsub.s32 3, %v142
    %v144 = vrot.slane %v47, %v143
    %vm149 = vcmask 523264
    %v151 = vsel %vm149, %v30, 0
    %153 = vmatprep.subr.bf16.mxu0 0
    %154 = vmatpush1.bf16.msra.mxu0 0
    %155 = vmatprep.subr.bf16.mxu0 0
    %156 = vmatpush1.bf16.msra.mxu0 0
    %157 = vmatprep.subr.bf16.mxu0 0
    %158 = vmatpush1.bf16.msra.mxu0 0
    %159 = vmatprep.subr.bf16.mxu0 0
    %160 = vmatpush1.bf16.msra.mxu0 0
    %161 = vmatprep.subr.bf16.mxu0 %v109
    %162 = vmatpush1.bf16.msra.mxu0 %v108
    %163 = vmatprep.subr.bf16.mxu0 %v105
    %164 = vmatpush1.bf16.msra.mxu0 %v104
    %165 = vmatprep.subr.bf16.mxu0 %v101
    %166 = vmatpush1.bf16.msra.mxu0 %v100
    %167 = vmatprep.subr.bf16.mxu0 %v97
    %168 = vmatpush1.bf16.msra.mxu0 %v96
    %169 = vmatprep.subr.bf16.mxu0 0
    %170 = vmatpush2.bf16.msra.mxu0 0
    %171 = vmatprep.subr.bf16.mxu0 0
    %172 = vmatpush2.bf16.msra.mxu0 0
    %173 = vmatprep.subr.bf16.mxu0 0
    %174 = vmatpush2.bf16.msra.mxu0 0
    %175 = vmatprep.subr.bf16.mxu0 0
    %176 = vmatpush2.bf16.msra.mxu0 0
    %177 = vmatprep.subr.bf16.mxu0 0
    %178 = vmatpush2.bf16.msra.mxu0 0
    %179 = vmatprep.subr.bf16.mxu0 0
    %180 = vmatpush2.bf16.msra.mxu0 0
    %181 = vmatprep.subr.bf16.mxu0 0
    %182 = vmatpush2.bf16.msra.mxu0 0
    %183 = vmatprep.subr.bf16.mxu0 0
    %184 = vmatpush2.bf16.msra.mxu0 0
    %185 = vmatprep.mubr.bf16.mxu0 0
    %186 = vmatmul.mubr.bf16.gmra.mxu0 %v151
    %v187 = vpop.f32.mrf.mxu0
    %v188 = vadd.f32 %v132, %v187
    %v189 = vpop.f32.mrf.mxu0
    %v190 = vadd.f32 %v136, %v189
    %v191 = vpop.f32.mrf.mxu0
    %v192 = vpop.f32.mrf.mxu0
    %193 = vdwg.mxu0
    %194 = vmatprep.subr.bf16.mxu0 0
    %195 = vmatpush1.bf16.msra.mxu0 0
    %196 = vmatprep.subr.bf16.mxu0 0
    %197 = vmatpush1.bf16.msra.mxu0 0
    %198 = vmatprep.subr.bf16.mxu0 0
    %199 = vmatpush1.bf16.msra.mxu0 0
    %200 = vmatprep.subr.bf16.mxu0 0
    %201 = vmatpush1.bf16.msra.mxu0 0
    %202 = vmatprep.subr.bf16.mxu0 %v111
    %203 = vmatpush1.bf16.msra.mxu0 %v110
    %204 = vmatprep.subr.bf16.mxu0 %v107
    %205 = vmatpush1.bf16.msra.mxu0 %v106
    %206 = vmatprep.subr.bf16.mxu0 %v103
    %207 = vmatpush1.bf16.msra.mxu0 %v102
    %208 = vmatprep.subr.bf16.mxu0 %v99
    %209 = vmatpush1.bf16.msra.mxu0 %v98
    %210 = vmatprep.subr.bf16.mxu0 0
    %211 = vmatpush2.bf16.msra.mxu0 0
    %212 = vmatprep.subr.bf16.mxu0 0
    %213 = vmatpush2.bf16.msra.mxu0 0
    %214 = vmatprep.subr.bf16.mxu0 0
    %215 = vmatpush2.bf16.msra.mxu0 0
    %216 = vmatprep.subr.bf16.mxu0 0
    %217 = vmatpush2.bf16.msra.mxu0 0
    %218 = vmatprep.subr.bf16.mxu0 0
    %219 = vmatpush2.bf16.msra.mxu0 0
    %220 = vmatprep.subr.bf16.mxu0 0
    %221 = vmatpush2.bf16.msra.mxu0 0
    %222 = vmatprep.subr.bf16.mxu0 0
    %223 = vmatpush2.bf16.msra.mxu0 0
    %224 = vmatprep.subr.bf16.mxu0 0
    %225 = vmatpush2.bf16.msra.mxu0 0
    %226 = vmatprep.mubr.bf16.mxu0 0
    %227 = vmatmul.mubr.bf16.gmra.mxu0 %v151
    %v228 = vpop.f32.mrf.mxu0
    %v229 = vadd.f32 %v140, %v228
    %v230 = vpop.f32.mrf.mxu0
    %v231 = vadd.f32 %v144, %v230
    %v232 = vpop.f32.mrf.mxu0
    %v233 = vpop.f32.mrf.mxu0
    %234 = vdwg.mxu0
    %v239 = vcombine.low %v188, %v190
    %v240 = vcombine.low %v229, %v231
    %v242 = vunpack.c.l.s4 1966171168
    %v243 = vunpack.c.0.s8 %v242
    %v244 = vlaneseq
    %v245 = vshrl.u32 %v244, 7
    %v246 = vsub.s32 %v243, %v245
    %v247 = vrot.slane %v239, %v246
    %v249 = vunpack.c.l.s4 1966171168
    %v250 = vunpack.c.0.s8 %v249
    %v251 = vlaneseq
    %v252 = vshrl.u32 %v251, 7
    %v253 = vsub.s32 %v250, %v252
    %v254 = vrot.slane %v240, %v253
    %v255 = vcombine.low %v247, %v254
    %v257 = vunpack.c.l.s4 1966171168
    %v258 = vunpack.c.0.s8 %v257
    %v259 = vlaneseq
    %v260 = vshrl.u32 %v259, 7
    %v261 = vsub.s32 %v258, %v260
    %v262 = vrot.slane %v255, %v261
    %v264 = vlaneseq
    %vm265 = vcmp.ge.s32.totalorder %v264, 0
    %vm266 = vcmp.lt.s32.totalorder %v264, 512
    %vm267 = vmand %vm265, %vm266
    %268 = vst.msk [vmem:[%s3] sm:$0xf] %vm267, %v262
    // Predicated region
    $region18: #{apply.1} parent=1 // pred_check
      _
    $region19: #{apply.1} parent=1 // pred_check_branch
      %270 = sbr.rel (0) target = $region21
    $region20: #{apply.1} parent=1 // pred_region
      _
    $region21: #{apply.1} parent=1 // pred_fallthru
      _
    // Predicated region
    $region22: #{apply.1} parent=1 // pred_check
      _
    $region23: #{apply.1} parent=1 // pred_check_branch
      %272 = sbr.rel (0) target = $region25
    $region24: #{apply.1} parent=1 // pred_region
      _
    $region25: #{apply.1} parent=1 // pred_fallthru
      _
    %273 = vsyncpa [#allocation3], 1

</llo_original>
